<compile_context>
chip_gen: v5e
topology: v5e:2x2
jax: 0.10.0
libtpu: 0.0.40
codegen_flags: <defaults>
</compile_context>

<pallas_src>
import numpy as np
import jax
import jax.numpy as jnp
from jax.experimental import pallas as pl
from jax.experimental.pallas import tpu as pltpu


def eiie_kernel(x_ref, last_ref, w1_ref, b1_ref, w2_ref, b2_ref, w3_ref, scal_ref,
                out_ref):
    # x_ref   : (F, R, T)    VMEM bf16  obs, feature-major, rows = flattened (batch, stock)
    # last_ref: (TB, S+1)    VMEM f32   last action (cash first, then stocks)
    # w1_ref  : (1, C1*F*K)  SMEM f32   conv1 weights, flattened (c1, f, k)
    # b1_ref  : (1, C1)      SMEM f32   conv1 bias
    # w2_ref  : (C1, N, C2)  VMEM f32   conv2 weights, contraction-major per c1 channel
    # b2_ref  : (1, C2)      VMEM f32   conv2 bias
    # w3_ref  : (C2, 1)      VMEM f32   final 1x1-conv weights for the C2 h2 channels
    # scal_ref: (1, 2)       SMEM f32   [final weight for last_stocks channel, final bias]
    # out_ref : (TB, S+1)    VMEM f32   softmax portfolio weights
    F, R, T = x_ref.shape
    C1, N, C2 = w2_ref.shape
    K = T - N + 1
    TB, Sp1 = out_ref.shape
    S = Sp1 - 1

    # ---- conv1 (1,K): all C1 channels via broadcast FMAs on the VPU -----------------
    # Accumulators start from the bias (saves a separate full-tile add pass).
    accs = [jnp.full((R, N), b1_ref[0, c1], jnp.float32) for c1 in range(C1)]
    for f in range(F):
        xf = x_ref[f].astype(jnp.float32)          # one aligned bf16 load + upcast per feature
        for k in range(K):
            xfk = xf[:, k:k + N]                   # in-kernel tap shift, shared by all C1
            for c1 in range(C1):
                accs[c1] = accs[c1] + xfk * w1_ref[0, (c1 * F + f) * K + k]

    # ---- ReLU + conv2 (1,N): C1 accumulated MXU dots (f32 accumulation), bias, ReLU --
    acc2 = jnp.dot(jnp.maximum(accs[0], 0.0), w2_ref[0],
                   preferred_element_type=jnp.float32)                     # (R, C2)
    for c1 in range(1, C1):
        acc2 = acc2 + jnp.dot(jnp.maximum(accs[c1], 0.0), w2_ref[c1],
                              preferred_element_type=jnp.float32)
    h2 = jnp.maximum(acc2 + b2_ref[...], 0.0)                              # (R, C2)

    # ---- final 1x1 conv over channels [last_stocks, h2]: tiny MXU dot + scalar terms -
    stock_col = jnp.dot(h2, w3_ref[...], preferred_element_type=jnp.float32)   # (R, 1)
    logits = stock_col.reshape(TB, S) + scal_ref[0, 0] * last_ref[:, 1:] + scal_ref[0, 1]

    # ---- softmax over [cash (logit 0), stocks] without a lane concat ------------------
    m = jnp.maximum(jnp.max(logits, axis=-1, keepdims=True), 0.0)   # include cash logit 0
    e = jnp.exp(logits - m)                                         # (TB, S)
    cash_e = jnp.exp(-m)                                            # (TB, 1)
    inv = 1.0 / (jnp.sum(e, axis=-1, keepdims=True) + cash_e)       # EXACT: rows sum to 1
    out_ref[:, :1] = cash_e * inv
    out_ref[:, 1:] = e * inv


def _pick_batch_tile(B, S, target_rows=4096):
    """Pick batch tile TB such that:
       * TB divides B,
       * the (TB, S+1) / (TB*S, T) blocks satisfy the (8,128) rule (TB % 8 == 0 or TB == B),
       * TB*S stays near `target_rows` (amortize ~0.35us per-grid-step overhead while the
         double-buffered bf16 obs block stays a few MiB -> fits v5e/v6e/v7x VMEM budgets),
       * prefer >= 2 grid steps when possible (v7x dual-TensorCore sharding).
    """
    cap = max(1, target_rows // max(S, 1))
    cands = [d for d in range(1, B + 1) if B % d == 0 and (d % 8 == 0 or d == B)]
    multi = [d for d in cands if d < B and d <= cap]
    if multi:
        return max(multi)
    within = [d for d in cands if d <= cap]
    if within:
        return max(within)
    return B   # awkward B (e.g. large prime): fall back to one full-batch step


def eiie_forward(obs, last_action, params):
    """obs: (B, F, S, T) float NCHW; last_action: (B, S+1) float (cash first)."""
    w1, b1, w2, b2, w3, b3 = params
    B, F, S, T = obs.shape
    C1, K = w1.shape[0], w1.shape[3]
    C2, N = w2.shape[0], w2.shape[3]
    assert N == T - K + 1

    # Single transpose (no im2col, no C1 duplication); ship the dominant stream in bf16
    # to halve HBM->VMEM bytes.  Conv1 taps are formed in-kernel with static lane shifts.
    obs_r = jnp.transpose(obs, (1, 0, 2, 3)).reshape(F, B * S, T).astype(jnp.bfloat16)
    last = last_action.astype(jnp.float32)

    w1_s = w1.reshape(1, C1 * F * K).astype(jnp.float32)                       # (c1,f,k) flat
    b1_s = b1.reshape(1, C1).astype(jnp.float32)
    w2k = jnp.transpose(w2.reshape(C2, C1, N), (1, 2, 0)).astype(jnp.float32)  # (C1, N, C2)
    b2k = b2.reshape(1, C2).astype(jnp.float32)
    w3f = w3.reshape(C2 + 1).astype(jnp.float32)
    w3col = w3f[1:].reshape(C2, 1)                                             # h2 channels
    scal = jnp.stack([w3f[0], b3.reshape(()).astype(jnp.float32)]).reshape(1, 2)

    TB = _pick_batch_tile(B, S)
    grid = (B // TB,)

    def full_spec(shape):
        return pl.BlockSpec(shape, lambda i: (0,) * len(shape))

    def smem_spec(shape):
        return pl.BlockSpec(shape, lambda i: (0,) * len(shape),
                            memory_space=pltpu.MemorySpace.SMEM)

    return pl.pallas_call(
        eiie_kernel,
        out_shape=jax.ShapeDtypeStruct((B, S + 1), jnp.float32),
        grid=grid,
        in_specs=[
            pl.BlockSpec((F, TB * S, T), lambda i: (0, i, 0)),   # obs stream (bf16)
            pl.BlockSpec((TB, S + 1), lambda i: (i, 0)),         # last action
            smem_spec((1, C1 * F * K)),                          # conv1 weights (scalars)
            smem_spec((1, C1)),                                  # conv1 bias (scalars)
            full_spec((C1, N, C2)),                              # conv2 weights
            full_spec((1, C2)),                                  # conv2 bias
            full_spec((C2, 1)),                                  # final conv weights (h2 chans)
            smem_spec((1, 2)),                                   # [w_last_stocks, final bias]
        ],
        out_specs=pl.BlockSpec((TB, S + 1), lambda i: (i, 0)),
        compiler_params=pltpu.CompilerParams(
            dimension_semantics=("parallel",),        # batch tiles shard across TCs (v7x)
            vmem_limit_bytes=32 * 1024 * 1024),       # explicit cap, safe on v5e/v6e/v7x
    )(obs_r, last, w1_s, b1_s, w2k, b2k, w3col, scal)


def eiie_reference(obs, last_action, params):
    """Pure-JAX reference matching the PyTorch module (f32, HIGHEST precision)."""
    w1, b1, w2, b2, w3, b3 = params
    B = obs.shape[0]
    hi = jax.lax.Precision.HIGHEST
    dn = ('NCHW', 'OIHW', 'NCHW')
    x = jax.lax.conv_general_dilated(obs, w1, (1, 1), 'VALID',
                                     dimension_numbers=dn, precision=hi)
    x = jnp.maximum(x + b1[None, :, None, None], 0.0)
    x = jax.lax.conv_general_dilated(x, w2, (1, 1), 'VALID',
                                     dimension_numbers=dn, precision=hi)
    x = jnp.maximum(x + b2[None, :, None, None], 0.0)                 # (B, C2, S, 1)
    stocks = last_action.shape[1] - 1
    last_stocks = last_action[:, 1:].reshape(B, 1, stocks, 1)
    x = jnp.concatenate([last_stocks, x], axis=1)                     # (B, C2+1, S, 1)
    x = jax.lax.conv_general_dilated(x, w3, (1, 1), 'VALID',
                                     dimension_numbers=dn, precision=hi)
    x = x + b3[None, :, None, None]                                   # (B, 1, S, 1)
    cash = jnp.zeros((B, 1, 1, 1), x.dtype)
    x = jnp.concatenate([cash, x], axis=2)[:, 0, :, 0]                # (B, S+1)
    return jax.nn.softmax(x, axis=-1)


if __name__ == "__main__":
    # Small shapes consistent with the module defaults.
    B, F, S = 2, 3, 8                 # batch, initial_features, stocks
    T, K = 50, 3                      # time_window, k_size
    C1, C2 = 2, 20                    # conv_1_features, conv_2_features
    N = T - K + 1

    key = jax.random.PRNGKey(0)
    ks = jax.random.split(key, 8)
    w1 = 0.10 * jax.random.normal(ks[0], (C1, F, 1, K), jnp.float32)
    b1 = 0.10 * jax.random.normal(ks[1], (C1,), jnp.float32)
    w2 = 0.05 * jax.random.normal(ks[2], (C2, C1, 1, N), jnp.float32)
    b2 = 0.05 * jax.random.normal(ks[3], (C2,), jnp.float32)
    w3 = 0.10 * jax.random.normal(ks[4], (1, C2 + 1, 1, 1), jnp.float32)
    b3 = 0.10 * jax.random.normal(ks[5], (1,), jnp.float32)
    params = (w1, b1, w2, b2, w3, b3)

    obs = jax.random.normal(ks[6], (B, F, S, T), jnp.float32)
    la = jax.random.uniform(ks[7], (B, S + 1), jnp.float32)
    last_action = la / jnp.sum(la, axis=-1, keepdims=True)

    out = eiie_forward(obs, last_action, params)
    out = jax.block_until_ready(out)

    ref = jax.block_until_ready(eiie_reference(obs, last_action, params))
    # 3e-3 tolerance accommodates the bf16 obs stream + default-precision MXU passes
    # vs the HIGHEST-precision f32 reference; comfortably met at these scales.
    np.testing.assert_allclose(np.asarray(out), np.asarray(ref), rtol=3e-3, atol=3e-3)
    assert out.shape == (B, S + 1)
    # Exact softmax normalization now (true divide), so rows sum to 1 within rounding.
    np.testing.assert_allclose(np.asarray(out).sum(axis=-1), 1.0, atol=1e-4)

    print("KERNEL_OK")
</pallas_src>

<mosaic_0001>
module attributes {stable_mosaic.version = 11 : i64} {
  func.func @eiie_kernel(%arg0: i32, %arg1: memref<3x16x50xbf16, #tpu.memory_space<vmem>>, %arg2: memref<2x9xf32, #tpu.memory_space<vmem>>, %arg3: memref<1x18xf32, #tpu.memory_space<smem>>, %arg4: memref<1x2xf32, #tpu.memory_space<smem>>, %arg5: memref<2x48x20xf32, #tpu.memory_space<vmem>>, %arg6: memref<1x20xf32, #tpu.memory_space<vmem>>, %arg7: memref<20x1xf32, #tpu.memory_space<vmem>>, %arg8: memref<1x2xf32, #tpu.memory_space<smem>>, %arg9: memref<2x9xf32, #tpu.memory_space<vmem>>) attributes {dimension_semantics = [#tpu.dimension_semantics<parallel>], iteration_bounds = array<i64: 1>, scalar_prefetch = 0 : i64, scratch_operands = 0 : i64, tpu.core_type = #tpu.core_type<tc>, window_params = [{transform_indices = @transform_0, window_bounds = array<i64: 3, 16, 50>}, {transform_indices = @transform_1, window_bounds = array<i64: 2, 9>}, {transform_indices = @transform_2, window_bounds = array<i64: 1, 18>}, {transform_indices = @transform_3, window_bounds = array<i64: 1, 2>}, {pipeline_mode = #tpu.pipeline_mode<synchronous>, transform_indices = @transform_4, window_bounds = array<i64: 2, 48, 20>}, {pipeline_mode = #tpu.pipeline_mode<synchronous>, transform_indices = @transform_5, window_bounds = array<i64: 1, 20>}, {pipeline_mode = #tpu.pipeline_mode<synchronous>, transform_indices = @transform_6, window_bounds = array<i64: 20, 1>}, {transform_indices = @transform_7, window_bounds = array<i64: 1, 2>}, {transform_indices = @transform_8, window_bounds = array<i64: 2, 9>}]} {
    %c0 = arith.constant 0 : index
    %c0_0 = arith.constant 0 : index
    %0 = memref.load %arg4[%c0, %c0_0] : memref<1x2xf32, #tpu.memory_space<smem>>
    %1 = vector.broadcast %0 : f32 to vector<16x48xf32>
    %c0_1 = arith.constant 0 : index
    %c1 = arith.constant 1 : index
    %2 = memref.load %arg4[%c0_1, %c1] : memref<1x2xf32, #tpu.memory_space<smem>>
    %3 = vector.broadcast %2 : f32 to vector<16x48xf32>
    %c0_2 = arith.constant 0 : index
    %c0_3 = arith.constant 0 : index
    %c0_4 = arith.constant 0 : index
    %4 = vector.load %arg1[%c0_2, %c0_3, %c0_4] : memref<3x16x50xbf16, #tpu.memory_space<vmem>>, vector<1x16x50xbf16>
    %5 = vector.shape_cast %4 : vector<1x16x50xbf16> to vector<16x50xbf16>
    %6 = arith.extf %5 : vector<16x50xbf16> to vector<16x50xf32>
    %7 = vector.extract_strided_slice %6 {offsets = [0, 0], sizes = [16, 48], strides = [1, 1]} : vector<16x50xf32> to vector<16x48xf32>
    %c0_5 = arith.constant 0 : index
    %c0_6 = arith.constant 0 : index
    %8 = memref.load %arg3[%c0_5, %c0_6] : memref<1x18xf32, #tpu.memory_space<smem>>
    %9 = vector.broadcast %8 : f32 to vector<16x48xf32>
    %10 = arith.mulf %7, %9 : vector<16x48xf32>
    %11 = arith.addf %1, %10 : vector<16x48xf32>
    %c0_7 = arith.constant 0 : index
    %c9 = arith.constant 9 : index
    %12 = memref.load %arg3[%c0_7, %c9] : memref<1x18xf32, #tpu.memory_space<smem>>
    %13 = vector.broadcast %12 : f32 to vector<16x48xf32>
    %14 = arith.mulf %7, %13 : vector<16x48xf32>
    %15 = arith.addf %3, %14 : vector<16x48xf32>
    %16 = vector.extract_strided_slice %6 {offsets = [0, 1], sizes = [16, 48], strides = [1, 1]} : vector<16x50xf32> to vector<16x48xf32>
    %c0_8 = arith.constant 0 : index
    %c1_9 = arith.constant 1 : index
    %17 = memref.load %arg3[%c0_8, %c1_9] : memref<1x18xf32, #tpu.memory_space<smem>>
    %18 = vector.broadcast %17 : f32 to vector<16x48xf32>
    %19 = arith.mulf %16, %18 : vector<16x48xf32>
    %20 = arith.addf %11, %19 : vector<16x48xf32>
    %c0_10 = arith.constant 0 : index
    %c10 = arith.constant 10 : index
    %21 = memref.load %arg3[%c0_10, %c10] : memref<1x18xf32, #tpu.memory_space<smem>>
    %22 = vector.broadcast %21 : f32 to vector<16x48xf32>
    %23 = arith.mulf %16, %22 : vector<16x48xf32>
    %24 = arith.addf %15, %23 : vector<16x48xf32>
    %25 = vector.extract_strided_slice %6 {offsets = [0, 2], sizes = [16, 48], strides = [1, 1]} : vector<16x50xf32> to vector<16x48xf32>
    %c0_11 = arith.constant 0 : index
    %c2 = arith.constant 2 : index
    %26 = memref.load %arg3[%c0_11, %c2] : memref<1x18xf32, #tpu.memory_space<smem>>
    %27 = vector.broadcast %26 : f32 to vector<16x48xf32>
    %28 = arith.mulf %25, %27 : vector<16x48xf32>
    %29 = arith.addf %20, %28 : vector<16x48xf32>
    %c0_12 = arith.constant 0 : index
    %c11 = arith.constant 11 : index
    %30 = memref.load %arg3[%c0_12, %c11] : memref<1x18xf32, #tpu.memory_space<smem>>
    %31 = vector.broadcast %30 : f32 to vector<16x48xf32>
    %32 = arith.mulf %25, %31 : vector<16x48xf32>
    %33 = arith.addf %24, %32 : vector<16x48xf32>
    %c1_13 = arith.constant 1 : index
    %c0_14 = arith.constant 0 : index
    %c0_15 = arith.constant 0 : index
    %34 = vector.load %arg1[%c1_13, %c0_14, %c0_15] : memref<3x16x50xbf16, #tpu.memory_space<vmem>>, vector<1x16x50xbf16>
    %35 = vector.shape_cast %34 : vector<1x16x50xbf16> to vector<16x50xbf16>
    %36 = arith.extf %35 : vector<16x50xbf16> to vector<16x50xf32>
    %37 = vector.extract_strided_slice %36 {offsets = [0, 0], sizes = [16, 48], strides = [1, 1]} : vector<16x50xf32> to vector<16x48xf32>
    %c0_16 = arith.constant 0 : index
    %c3 = arith.constant 3 : index
    %38 = memref.load %arg3[%c0_16, %c3] : memref<1x18xf32, #tpu.memory_space<smem>>
    %39 = vector.broadcast %38 : f32 to vector<16x48xf32>
    %40 = arith.mulf %37, %39 : vector<16x48xf32>
    %41 = arith.addf %29, %40 : vector<16x48xf32>
    %c0_17 = arith.constant 0 : index
    %c12 = arith.constant 12 : index
    %42 = memref.load %arg3[%c0_17, %c12] : memref<1x18xf32, #tpu.memory_space<smem>>
    %43 = vector.broadcast %42 : f32 to vector<16x48xf32>
    %44 = arith.mulf %37, %43 : vector<16x48xf32>
    %45 = arith.addf %33, %44 : vector<16x48xf32>
    %46 = vector.extract_strided_slice %36 {offsets = [0, 1], sizes = [16, 48], strides = [1, 1]} : vector<16x50xf32> to vector<16x48xf32>
    %c0_18 = arith.constant 0 : index
    %c4 = arith.constant 4 : index
    %47 = memref.load %arg3[%c0_18, %c4] : memref<1x18xf32, #tpu.memory_space<smem>>
    %48 = vector.broadcast %47 : f32 to vector<16x48xf32>
    %49 = arith.mulf %46, %48 : vector<16x48xf32>
    %50 = arith.addf %41, %49 : vector<16x48xf32>
    %c0_19 = arith.constant 0 : index
    %c13 = arith.constant 13 : index
    %51 = memref.load %arg3[%c0_19, %c13] : memref<1x18xf32, #tpu.memory_space<smem>>
    %52 = vector.broadcast %51 : f32 to vector<16x48xf32>
    %53 = arith.mulf %46, %52 : vector<16x48xf32>
    %54 = arith.addf %45, %53 : vector<16x48xf32>
    %55 = vector.extract_strided_slice %36 {offsets = [0, 2], sizes = [16, 48], strides = [1, 1]} : vector<16x50xf32> to vector<16x48xf32>
    %c0_20 = arith.constant 0 : index
    %c5 = arith.constant 5 : index
    %56 = memref.load %arg3[%c0_20, %c5] : memref<1x18xf32, #tpu.memory_space<smem>>
    %57 = vector.broadcast %56 : f32 to vector<16x48xf32>
    %58 = arith.mulf %55, %57 : vector<16x48xf32>
    %59 = arith.addf %50, %58 : vector<16x48xf32>
    %c0_21 = arith.constant 0 : index
    %c14 = arith.constant 14 : index
    %60 = memref.load %arg3[%c0_21, %c14] : memref<1x18xf32, #tpu.memory_space<smem>>
    %61 = vector.broadcast %60 : f32 to vector<16x48xf32>
    %62 = arith.mulf %55, %61 : vector<16x48xf32>
    %63 = arith.addf %54, %62 : vector<16x48xf32>
    %c2_22 = arith.constant 2 : index
    %c0_23 = arith.constant 0 : index
    %c0_24 = arith.constant 0 : index
    %64 = vector.load %arg1[%c2_22, %c0_23, %c0_24] : memref<3x16x50xbf16, #tpu.memory_space<vmem>>, vector<1x16x50xbf16>
    %65 = vector.shape_cast %64 : vector<1x16x50xbf16> to vector<16x50xbf16>
    %66 = arith.extf %65 : vector<16x50xbf16> to vector<16x50xf32>
    %67 = vector.extract_strided_slice %66 {offsets = [0, 0], sizes = [16, 48], strides = [1, 1]} : vector<16x50xf32> to vector<16x48xf32>
    %c0_25 = arith.constant 0 : index
    %c6 = arith.constant 6 : index
    %68 = memref.load %arg3[%c0_25, %c6] : memref<1x18xf32, #tpu.memory_space<smem>>
    %69 = vector.broadcast %68 : f32 to vector<16x48xf32>
    %70 = arith.mulf %67, %69 : vector<16x48xf32>
    %71 = arith.addf %59, %70 : vector<16x48xf32>
    %c0_26 = arith.constant 0 : index
    %c15 = arith.constant 15 : index
    %72 = memref.load %arg3[%c0_26, %c15] : memref<1x18xf32, #tpu.memory_space<smem>>
    %73 = vector.broadcast %72 : f32 to vector<16x48xf32>
    %74 = arith.mulf %67, %73 : vector<16x48xf32>
    %75 = arith.addf %63, %74 : vector<16x48xf32>
    %76 = vector.extract_strided_slice %66 {offsets = [0, 1], sizes = [16, 48], strides = [1, 1]} : vector<16x50xf32> to vector<16x48xf32>
    %c0_27 = arith.constant 0 : index
    %c7 = arith.constant 7 : index
    %77 = memref.load %arg3[%c0_27, %c7] : memref<1x18xf32, #tpu.memory_space<smem>>
    %78 = vector.broadcast %77 : f32 to vector<16x48xf32>
    %79 = arith.mulf %76, %78 : vector<16x48xf32>
    %80 = arith.addf %71, %79 : vector<16x48xf32>
    %c0_28 = arith.constant 0 : index
    %c16 = arith.constant 16 : index
    %81 = memref.load %arg3[%c0_28, %c16] : memref<1x18xf32, #tpu.memory_space<smem>>
    %82 = vector.broadcast %81 : f32 to vector<16x48xf32>
    %83 = arith.mulf %76, %82 : vector<16x48xf32>
    %84 = arith.addf %75, %83 : vector<16x48xf32>
    %85 = vector.extract_strided_slice %66 {offsets = [0, 2], sizes = [16, 48], strides = [1, 1]} : vector<16x50xf32> to vector<16x48xf32>
    %c0_29 = arith.constant 0 : index
    %c8 = arith.constant 8 : index
    %86 = memref.load %arg3[%c0_29, %c8] : memref<1x18xf32, #tpu.memory_space<smem>>
    %87 = vector.broadcast %86 : f32 to vector<16x48xf32>
    %88 = arith.mulf %85, %87 : vector<16x48xf32>
    %89 = arith.addf %80, %88 : vector<16x48xf32>
    %c0_30 = arith.constant 0 : index
    %c17 = arith.constant 17 : index
    %90 = memref.load %arg3[%c0_30, %c17] : memref<1x18xf32, #tpu.memory_space<smem>>
    %91 = vector.broadcast %90 : f32 to vector<16x48xf32>
    %92 = arith.mulf %85, %91 : vector<16x48xf32>
    %93 = arith.addf %84, %92 : vector<16x48xf32>
    %cst = arith.constant 0.000000e+00 : f32
    %94 = vector.broadcast %cst : f32 to vector<16x48xf32>
    %95 = arith.maximumf %89, %94 : vector<16x48xf32>
    %c0_31 = arith.constant 0 : index
    %c0_32 = arith.constant 0 : index
    %c0_33 = arith.constant 0 : index
    %96 = vector.load %arg5[%c0_31, %c0_32, %c0_33] : memref<2x48x20xf32, #tpu.memory_space<vmem>>, vector<1x48x20xf32>
    %97 = vector.shape_cast %96 : vector<1x48x20xf32> to vector<48x20xf32>
    %cst_34 = arith.constant dense<0.000000e+00> : vector<16x20xf32>
    %98 = tpu.matmul %95, %97, %cst_34 {dimension_numbers = #tpu.dot_dimension_numbers<[1], [0], [0], [1], [0, 0, 1, 1], [], []>} : vector<16x48xf32>, vector<48x20xf32>, vector<16x20xf32> -> vector<16x20xf32>
    %cst_35 = arith.constant 0.000000e+00 : f32
    %99 = vector.broadcast %cst_35 : f32 to vector<16x48xf32>
    %100 = arith.maximumf %93, %99 : vector<16x48xf32>
    %c1_36 = arith.constant 1 : index
    %c0_37 = arith.constant 0 : index
    %c0_38 = arith.constant 0 : index
    %101 = vector.load %arg5[%c1_36, %c0_37, %c0_38] : memref<2x48x20xf32, #tpu.memory_space<vmem>>, vector<1x48x20xf32>
    %102 = vector.shape_cast %101 : vector<1x48x20xf32> to vector<48x20xf32>
    %cst_39 = arith.constant dense<0.000000e+00> : vector<16x20xf32>
    %103 = tpu.matmul %100, %102, %cst_39 {dimension_numbers = #tpu.dot_dimension_numbers<[1], [0], [0], [1], [0, 0, 1, 1], [], []>} : vector<16x48xf32>, vector<48x20xf32>, vector<16x20xf32> -> vector<16x20xf32>
    %104 = arith.addf %98, %103 : vector<16x20xf32>
    %c0_40 = arith.constant 0 : index
    %c0_41 = arith.constant 0 : index
    %105 = vector.load %arg6[%c0_40, %c0_41] : memref<1x20xf32, #tpu.memory_space<vmem>>, vector<1x20xf32>
    %106 = vector.broadcast %105 : vector<1x20xf32> to vector<16x20xf32>
    %107 = arith.addf %104, %106 : vector<16x20xf32>
    %cst_42 = arith.constant 0.000000e+00 : f32
    %108 = vector.broadcast %cst_42 : f32 to vector<16x20xf32>
    %109 = arith.maximumf %107, %108 : vector<16x20xf32>
    %c0_43 = arith.constant 0 : index
    %c0_44 = arith.constant 0 : index
    %110 = vector.load %arg7[%c0_43, %c0_44] : memref<20x1xf32, #tpu.memory_space<vmem>>, vector<20x1xf32>
    %cst_45 = arith.constant dense<0.000000e+00> : vector<16x1xf32>
    %111 = tpu.matmul %109, %110, %cst_45 {dimension_numbers = #tpu.dot_dimension_numbers<[1], [0], [0], [1], [0, 0, 1, 1], [], []>} : vector<16x20xf32>, vector<20x1xf32>, vector<16x1xf32> -> vector<16x1xf32>
    %112 = vector.shape_cast %111 : vector<16x1xf32> to vector<2x8xf32>
    %c0_46 = arith.constant 0 : index
    %c0_47 = arith.constant 0 : index
    %113 = memref.load %arg8[%c0_46, %c0_47] : memref<1x2xf32, #tpu.memory_space<smem>>
    %c0_48 = arith.constant 0 : index
    %c1_49 = arith.constant 1 : index
    %114 = vector.load %arg2[%c0_48, %c1_49] : memref<2x9xf32, #tpu.memory_space<vmem>>, vector<2x8xf32>
    %115 = vector.broadcast %113 : f32 to vector<2x8xf32>
    %116 = arith.mulf %115, %114 : vector<2x8xf32>
    %117 = arith.addf %112, %116 : vector<2x8xf32>
    %c0_50 = arith.constant 0 : index
    %c1_51 = arith.constant 1 : index
    %118 = memref.load %arg8[%c0_50, %c1_51] : memref<1x2xf32, #tpu.memory_space<smem>>
    %119 = vector.broadcast %118 : f32 to vector<2x8xf32>
    %120 = arith.addf %117, %119 : vector<2x8xf32>
    %cst_52 = arith.constant dense<0xFF800000> : vector<2xf32>
    %121 = vector.multi_reduction <maximumf>, %120, %cst_52 [1] : vector<2x8xf32> to vector<2xf32>
    %122 = vector.shape_cast %121 : vector<2xf32> to vector<2x1xf32>
    %cst_53 = arith.constant 0.000000e+00 : f32
    %123 = vector.broadcast %cst_53 : f32 to vector<2x1xf32>
    %124 = arith.maximumf %122, %123 : vector<2x1xf32>
    %125 = vector.broadcast %124 : vector<2x1xf32> to vector<2x8xf32>
    %126 = arith.subf %120, %125 : vector<2x8xf32>
    %127 = math.exp %126 : vector<2x8xf32>
    %cst_54 = arith.constant 0.000000e+00 : f32
    %128 = vector.broadcast %cst_54 : f32 to vector<2x1xf32>
    %129 = arith.subf %128, %124 : vector<2x1xf32>
    %130 = math.exp %129 : vector<2x1xf32>
    %cst_55 = arith.constant dense<0.000000e+00> : vector<2xf32>
    %131 = vector.multi_reduction <add>, %127, %cst_55 [1] : vector<2x8xf32> to vector<2xf32>
    %132 = vector.shape_cast %131 : vector<2xf32> to vector<2x1xf32>
    %133 = arith.addf %132, %130 : vector<2x1xf32>
    %cst_56 = arith.constant 1.000000e+00 : f32
    %134 = vector.broadcast %cst_56 : f32 to vector<2x1xf32>
    %135 = arith.divf %134, %133 : vector<2x1xf32>
    %136 = arith.mulf %130, %135 : vector<2x1xf32>
    %c0_57 = arith.constant 0 : index
    %c0_58 = arith.constant 0 : index
    %137 = vector.load %arg9[%c0_57, %c0_58] : memref<2x9xf32, #tpu.memory_space<vmem>>, vector<2x1xf32>
    tpu.vector_store %arg9[%c0_57, %c0_58], %136 {strides = array<i32>} : memref<2x9xf32, #tpu.memory_space<vmem>>, vector<2x1xf32>,
    %138 = vector.broadcast %135 : vector<2x1xf32> to vector<2x8xf32>
    %139 = arith.mulf %127, %138 : vector<2x8xf32>
    %c0_59 = arith.constant 0 : index
    %c1_60 = arith.constant 1 : index
    %140 = vector.load %arg9[%c0_59, %c1_60] : memref<2x9xf32, #tpu.memory_space<vmem>>, vector<2x8xf32>
    tpu.vector_store %arg9[%c0_59, %c1_60], %139 {strides = array<i32>} : memref<2x9xf32, #tpu.memory_space<vmem>>, vector<2x8xf32>,
    return
  }
  func.func @transform_0(%arg0: i32) -> (i32, i32, i32) {
    %c0_i32 = arith.constant 0 : i32
    %c0_i32_0 = arith.constant 0 : i32
    %c0_i32_1 = arith.constant 0 : i32
    return %c0_i32, %arg0, %c0_i32_0 : i32, i32, i32
  }
  func.func @transform_1(%arg0: i32) -> (i32, i32) {
    %c0_i32 = arith.constant 0 : i32
    %c0_i32_0 = arith.constant 0 : i32
    return %arg0, %c0_i32 : i32, i32
  }
  func.func @transform_2(%arg0: i32) -> (i32, i32) {
    %c0_i32 = arith.constant 0 : i32
    %c0_i32_0 = arith.constant 0 : i32
    %c0_i32_1 = arith.constant 0 : i32
    return %c0_i32, %c0_i32_0 : i32, i32
  }
  func.func @transform_3(%arg0: i32) -> (i32, i32) {
    %c0_i32 = arith.constant 0 : i32
    %c0_i32_0 = arith.constant 0 : i32
    %c0_i32_1 = arith.constant 0 : i32
    return %c0_i32, %c0_i32_0 : i32, i32
  }
  func.func @transform_4(%arg0: i32) -> (i32, i32, i32) {
    %c0_i32 = arith.constant 0 : i32
    %c0_i32_0 = arith.constant 0 : i32
    %c0_i32_1 = arith.constant 0 : i32
    %c0_i32_2 = arith.constant 0 : i32
    return %c0_i32, %c0_i32_0, %c0_i32_1 : i32, i32, i32
  }
  func.func @transform_5(%arg0: i32) -> (i32, i32) {
    %c0_i32 = arith.constant 0 : i32
    %c0_i32_0 = arith.constant 0 : i32
    %c0_i32_1 = arith.constant 0 : i32
    return %c0_i32, %c0_i32_0 : i32, i32
  }
  func.func @transform_6(%arg0: i32) -> (i32, i32) {
    %c0_i32 = arith.constant 0 : i32
    %c0_i32_0 = arith.constant 0 : i32
    %c0_i32_1 = arith.constant 0 : i32
    return %c0_i32, %c0_i32_0 : i32, i32
  }
  func.func @transform_7(%arg0: i32) -> (i32, i32) {
    %c0_i32 = arith.constant 0 : i32
    %c0_i32_0 = arith.constant 0 : i32
    %c0_i32_1 = arith.constant 0 : i32
    return %c0_i32, %c0_i32_0 : i32, i32
  }
  func.func @transform_8(%arg0: i32) -> (i32, i32) {
    %c0_i32 = arith.constant 0 : i32
    %c0_i32_0 = arith.constant 0 : i32
    return %arg0, %c0_i32 : i32, i32
  }
}

</mosaic_0001>

<llo_original>
// kernel: tpu_custom_call.1
$region0: #{tpu_custom_call.1}
  #allocation0 [shape = 'u32[]', space=smem, size = 0x4, offset = 0x4, fixed_abs, tag = 'smem constant byte address 0x4 - core index']
  #allocation1 [shape = 'u32[72,128]{1,0:T(1,128)}', space=vmem, size = 0x9000, scoped, tag = 'internal scratch']
  %s0 = inlined_call_operand.vmem [shape: bf16[3,16,50], index: 0, kind: input, shape index: {}]
  %s1 = inlined_call_operand.vmem [shape: f32[2,9], index: 1, kind: input, shape index: {}]
  %s2 = inlined_call_operand.vmem [shape: f32[1,18], index: 2, kind: input, shape index: {}]
  %s3 = inlined_call_operand.vmem [shape: f32[1,2], index: 3, kind: input, shape index: {}]
  %s4 = inlined_call_operand.vmem [shape: f32[2,48,20], index: 4, kind: input, shape index: {}]
  %s5 = inlined_call_operand.vmem [shape: f32[1,20], index: 5, kind: input, shape index: {}]
  %s6 = inlined_call_operand.vmem [shape: f32[20,1], index: 6, kind: input, shape index: {}]
  %s7 = inlined_call_operand.vmem [shape: f32[1,2], index: 7, kind: input, shape index: {}]
  %s8 = inlined_call_operand.hbm [shape: f32[2,9], index: 8, kind: output, shape index: {}]
  %s9 = sld [smem:[#allocation0]]
  $region54: #{tpu_custom_call.1} parent=0
    _
  %s11 = ssub.s32 1, %s9
  %s12 = scalar_select 0, %s11, %s9
  $region1: #{tpu_custom_call.1} parent=0
    #allocation2 [shape = 'u8[512]{0}', space=smem, size = 0x200, scoped, tag = 'input window, operand 2, single buffered']
    #allocation3 [shape = 's32[1]{0}', space=sflag, size = 0x4, scoped, tag = 'scoped memory for tpu_custom_call.1']
    #allocation4 [shape = 's32[1]{0}', space=sflag, size = 0x4, scoped, tag = 'scoped memory for tpu_custom_call.1']
    #allocation5 [shape = 'u8[512]{0}', space=smem, size = 0x200, scoped, tag = 'input window, operand 3, single buffered']
    #allocation6 [shape = 's32[1]{0}', space=sflag, size = 0x4, scoped, tag = 'scoped memory for tpu_custom_call.1']
    #allocation7 [shape = 'u8[512]{0}', space=smem, size = 0x200, scoped, tag = 'input window, operand 7, single buffered']
    #allocation8 [shape = 'u8[1024]{0}', space=vmem, size = 0x400, scoped, tag = 'output window, operand 0, single buffered']
    %13 = vsyncpa [#allocation4], 0
    %14 = vsyncpa [#allocation6], 0
    %15 = vsyncpa [#allocation3], 0
    // Predicated region
    $region2: #{tpu_custom_call.1} parent=1 // pred_check
      _
    $region3: #{tpu_custom_call.1} parent=1 // pred_check_branch
      %17 = sbr.rel (0) target = $region5
    $region4: #{tpu_custom_call.1} parent=1 // pred_region
      _
    $region5: #{tpu_custom_call.1} parent=1 // pred_fallthru
      _
    // Predicated region
    $region6: #{tpu_custom_call.1} parent=1 // pred_check
      _
    $region7: #{tpu_custom_call.1} parent=1 // pred_check_branch
      %19 = sbr.rel (0) target = $region9
    $region8: #{tpu_custom_call.1} parent=1 // pred_region
      _
    $region9: #{tpu_custom_call.1} parent=1 // pred_fallthru
      _
    // Predicated region
    $region10: #{tpu_custom_call.1} parent=1 // pred_check
      _
    $region11: #{tpu_custom_call.1} parent=1 // pred_check_branch
      %21 = sbr.rel (0) target = $region13
    $region12: #{tpu_custom_call.1} parent=1 // pred_region
      %23 = vsyncadd [#allocation4], 0
      %s25 = sshll.u32 %s2, 4
      %s26 = int_to_ptr.vmem [resolvable:$true] %s25
      %28 = dma.vmem_to_smem %s26, 16, [#allocation2], [#allocation4]
    $region13: #{tpu_custom_call.1} parent=1 // pred_fallthru
      _
    // Predicated region
    $region14: #{tpu_custom_call.1} parent=1 // pred_check
      _
    $region15: #{tpu_custom_call.1} parent=1 // pred_check_branch
      %30 = sbr.rel (0) target = $region17
    $region16: #{tpu_custom_call.1} parent=1 // pred_region
      %32 = vsyncadd [#allocation6], 0
      %s34 = sshll.u32 %s3, 4
      %s35 = int_to_ptr.vmem [resolvable:$true] %s34
      %37 = dma.vmem_to_smem %s35, 16, [#allocation5], [#allocation6]
    $region17: #{tpu_custom_call.1} parent=1 // pred_fallthru
      _
    // Predicated region
    $region18: #{tpu_custom_call.1} parent=1 // pred_check
      _
    $region19: #{tpu_custom_call.1} parent=1 // pred_check_branch
      %39 = sbr.rel (0) target = $region21
    $region20: #{tpu_custom_call.1} parent=1 // pred_region
      _
    $region21: #{tpu_custom_call.1} parent=1 // pred_fallthru
      _
    // Predicated region
    $region22: #{tpu_custom_call.1} parent=1 // pred_check
      _
    $region23: #{tpu_custom_call.1} parent=1 // pred_check_branch
      %41 = sbr.rel (0) target = $region25
    $region24: #{tpu_custom_call.1} parent=1 // pred_region
      _
    $region25: #{tpu_custom_call.1} parent=1 // pred_fallthru
      _
    // Predicated region
    $region26: #{tpu_custom_call.1} parent=1 // pred_check
      _
    $region27: #{tpu_custom_call.1} parent=1 // pred_check_branch
      %43 = sbr.rel (0) target = $region29
    $region28: #{tpu_custom_call.1} parent=1 // pred_region
      _
    $region29: #{tpu_custom_call.1} parent=1 // pred_fallthru
      _
    // Predicated region
    $region30: #{tpu_custom_call.1} parent=1 // pred_check
      _
    $region31: #{tpu_custom_call.1} parent=1 // pred_check_branch
      %45 = sbr.rel (0) target = $region33
    $region32: #{tpu_custom_call.1} parent=1 // pred_region
      %47 = vsyncadd [#allocation6], 0
      %s49 = sshll.u32 %s7, 4
      %s50 = int_to_ptr.vmem [resolvable:$true] %s49
      %52 = dma.vmem_to_smem %s50, 16, [#allocation7], [#allocation6]
    $region33: #{tpu_custom_call.1} parent=1 // pred_fallthru
      _
    // Predicated region
    $region34: #{tpu_custom_call.1} parent=1 // pred_check
      _
    $region35: #{tpu_custom_call.1} parent=1 // pred_check_branch
      %54 = sbr.rel (0) target = $region37
    $region36: #{tpu_custom_call.1} parent=1 // pred_region
      %56 = dma.done [#allocation4], 16
    $region37: #{tpu_custom_call.1} parent=1 // pred_fallthru
      _
    // Predicated region
    $region38: #{tpu_custom_call.1} parent=1 // pred_check
      _
    $region39: #{tpu_custom_call.1} parent=1 // pred_check_branch
      %58 = sbr.rel (0) target = $region41
    $region40: #{tpu_custom_call.1} parent=1 // pred_region
      %60 = dma.done [#allocation6], 16
    $region41: #{tpu_custom_call.1} parent=1 // pred_fallthru
      _
    // Predicated region
    $region42: #{tpu_custom_call.1} parent=1 // pred_check
      _
    $region43: #{tpu_custom_call.1} parent=1 // pred_check_branch
      %62 = sbr.rel (0) target = $region45
    $region44: #{tpu_custom_call.1} parent=1 // pred_region
      %64 = dma.done [#allocation6], 16
    $region45: #{tpu_custom_call.1} parent=1 // pred_fallthru
      _
    %65 = sfence
    %s66 = sld [smem:[#allocation5]]
    %v67 = vstv %s66
    %s68 = sld [smem:[#allocation5 + $0x1]]
    %v69 = vstv %s68
    %v70 = vld [vmem:[%s0] sm:$0xf]
    %v71 = vld [vmem:[%s0 + $0x4] sm:$0xf]
    %v72 = vunpack.c.l.bf16 %v70
    %v73 = vunpack.c.l.bf16 %v71
    %s74 = sld [smem:[#allocation2]]
    %v75 = vstv %s74
    %v76 = vmul.f32 %v72, %v75
    %v77 = vmul.f32 %v73, %v75
    %v78 = vadd.f32 %v67, %v76
    %v79 = vadd.f32 %v67, %v77
    %s80 = sld [smem:[#allocation2 + $0x9]]
    %v81 = vstv %s80
    %v82 = vmul.f32 %v72, %v81
    %v83 = vmul.f32 %v73, %v81
    %v84 = vadd.f32 %v69, %v82
    %v85 = vadd.f32 %v69, %v83
    %s86 = sld [smem:[#allocation2 + $0x1]]
    %v87 = vstv %s86
    %v88 = vmul.f32 %v72, %v87
    %v89 = vmul.f32 %v73, %v87
    %92 = vrot.lane.b32.xlu0 %v88, 127
    %v93 = vpop.permute.xlu0 %92
    %94 = vrot.lane.b32.xlu0 %v89, 127
    %v95 = vpop.permute.xlu0 %94
    %v98 = vadd.f32 %v78, %v93
    %v99 = vadd.f32 %v79, %v95
    %s100 = sld [smem:[#allocation2 + $0xa]]
    %v101 = vstv %s100
    %v102 = vmul.f32 %v72, %v101
    %v103 = vmul.f32 %v73, %v101
    %106 = vrot.lane.b32.xlu0 %v102, 127
    %v107 = vpop.permute.xlu0 %106
    %108 = vrot.lane.b32.xlu0 %v103, 127
    %v109 = vpop.permute.xlu0 %108
    %v112 = vadd.f32 %v84, %v107
    %v113 = vadd.f32 %v85, %v109
    %s114 = sld [smem:[#allocation2 + $0x2]]
    %v115 = vstv %s114
    %v116 = vmul.f32 %v72, %v115
    %v117 = vmul.f32 %v73, %v115
    %120 = vrot.lane.b32.xlu0 %v116, 126
    %v121 = vpop.permute.xlu0 %120
    %122 = vrot.lane.b32.xlu0 %v117, 126
    %v123 = vpop.permute.xlu0 %122
    %v126 = vadd.f32 %v98, %v121
    %v127 = vadd.f32 %v99, %v123
    %s128 = sld [smem:[#allocation2 + $0xb]]
    %v129 = vstv %s128
    %v130 = vmul.f32 %v72, %v129
    %v131 = vmul.f32 %v73, %v129
    %134 = vrot.lane.b32.xlu0 %v130, 126
    %v135 = vpop.permute.xlu0 %134
    %136 = vrot.lane.b32.xlu0 %v131, 126
    %v137 = vpop.permute.xlu0 %136
    %v140 = vadd.f32 %v112, %v135
    %v141 = vadd.f32 %v113, %v137
    %s142 = scalar_lea.vmem %s0, 8
    %v143 = vld [vmem:[%s142] sm:$0xf]
    %v144 = vld [vmem:[%s142 + $0x4] sm:$0xf]
    %v145 = vunpack.c.l.bf16 %v143
    %v146 = vunpack.c.l.bf16 %v144
    %s147 = sld [smem:[#allocation2 + $0x3]]
    %v148 = vstv %s147
    %v149 = vmul.f32 %v145, %v148
    %v150 = vmul.f32 %v146, %v148
    %v151 = vadd.f32 %v126, %v149
    %v152 = vadd.f32 %v127, %v150
    %s153 = sld [smem:[#allocation2 + $0xc]]
    %v154 = vstv %s153
    %v155 = vmul.f32 %v145, %v154
    %v156 = vmul.f32 %v146, %v154
    %v157 = vadd.f32 %v140, %v155
    %v158 = vadd.f32 %v141, %v156
    %s159 = sld [smem:[#allocation2 + $0x4]]
    %v160 = vstv %s159
    %v161 = vmul.f32 %v145, %v160
    %v162 = vmul.f32 %v146, %v160
    %165 = vrot.lane.b32.xlu0 %v161, 127
    %v166 = vpop.permute.xlu0 %165
    %167 = vrot.lane.b32.xlu0 %v162, 127
    %v168 = vpop.permute.xlu0 %167
    %v171 = vadd.f32 %v151, %v166
    %v172 = vadd.f32 %v152, %v168
    %s173 = sld [smem:[#allocation2 + $0xd]]
    %v174 = vstv %s173
    %v175 = vmul.f32 %v145, %v174
    %v176 = vmul.f32 %v146, %v174
    %179 = vrot.lane.b32.xlu0 %v175, 127
    %v180 = vpop.permute.xlu0 %179
    %181 = vrot.lane.b32.xlu0 %v176, 127
    %v182 = vpop.permute.xlu0 %181
    %v185 = vadd.f32 %v157, %v180
    %v186 = vadd.f32 %v158, %v182
    %s187 = sld [smem:[#allocation2 + $0x5]]
    %v188 = vstv %s187
    %v189 = vmul.f32 %v145, %v188
    %v190 = vmul.f32 %v146, %v188
    %193 = vrot.lane.b32.xlu0 %v189, 126
    %v194 = vpop.permute.xlu0 %193
    %195 = vrot.lane.b32.xlu0 %v190, 126
    %v196 = vpop.permute.xlu0 %195
    %v199 = vadd.f32 %v171, %v194
    %v200 = vadd.f32 %v172, %v196
    %s201 = sld [smem:[#allocation2 + $0xe]]
    %v202 = vstv %s201
    %v203 = vmul.f32 %v145, %v202
    %v204 = vmul.f32 %v146, %v202
    %207 = vrot.lane.b32.xlu0 %v203, 126
    %v208 = vpop.permute.xlu0 %207
    %209 = vrot.lane.b32.xlu0 %v204, 126
    %v210 = vpop.permute.xlu0 %209
    %v213 = vadd.f32 %v185, %v208
    %v214 = vadd.f32 %v186, %v210
    %s215 = scalar_lea.vmem %s0, 16
    %v216 = vld [vmem:[%s215] sm:$0xf]
    %v217 = vld [vmem:[%s215 + $0x4] sm:$0xf]
    %v218 = vunpack.c.l.bf16 %v216
    %v219 = vunpack.c.l.bf16 %v217
    %s220 = sld [smem:[#allocation2 + $0x6]]
    %v221 = vstv %s220
    %v222 = vmul.f32 %v218, %v221
    %v223 = vmul.f32 %v219, %v221
    %v224 = vadd.f32 %v199, %v222
    %v225 = vadd.f32 %v200, %v223
    %s226 = sld [smem:[#allocation2 + $0xf]]
    %v227 = vstv %s226
    %v228 = vmul.f32 %v218, %v227
    %v229 = vmul.f32 %v219, %v227
    %v230 = vadd.f32 %v213, %v228
    %v231 = vadd.f32 %v214, %v229
    %s232 = sld [smem:[#allocation2 + $0x7]]
    %v233 = vstv %s232
    %v234 = vmul.f32 %v218, %v233
    %v235 = vmul.f32 %v219, %v233
    %238 = vrot.lane.b32.xlu0 %v234, 127
    %v239 = vpop.permute.xlu0 %238
    %240 = vrot.lane.b32.xlu0 %v235, 127
    %v241 = vpop.permute.xlu0 %240
    %v244 = vadd.f32 %v224, %v239
    %v245 = vadd.f32 %v225, %v241
    %s246 = sld [smem:[#allocation2 + $0x10]]
    %v247 = vstv %s246
    %v248 = vmul.f32 %v218, %v247
    %v249 = vmul.f32 %v219, %v247
    %252 = vrot.lane.b32.xlu0 %v248, 127
    %v253 = vpop.permute.xlu0 %252
    %254 = vrot.lane.b32.xlu0 %v249, 127
    %v255 = vpop.permute.xlu0 %254
    %v258 = vadd.f32 %v230, %v253
    %v259 = vadd.f32 %v231, %v255
    %s260 = sld [smem:[#allocation2 + $0x8]]
    %v261 = vstv %s260
    %v262 = vmul.f32 %v218, %v261
    %v263 = vmul.f32 %v219, %v261
    %266 = vrot.lane.b32.xlu0 %v262, 126
    %v267 = vpop.permute.xlu0 %266
    %268 = vrot.lane.b32.xlu0 %v263, 126
    %v269 = vpop.permute.xlu0 %268
    %v272 = vadd.f32 %v244, %v267
    %v273 = vadd.f32 %v245, %v269
    %s274 = sld [smem:[#allocation2 + $0x11]]
    %v275 = vstv %s274
    %v276 = vmul.f32 %v218, %v275
    %v277 = vmul.f32 %v219, %v275
    %280 = vrot.lane.b32.xlu0 %v276, 126
    %v281 = vpop.permute.xlu0 %280
    %282 = vrot.lane.b32.xlu0 %v277, 126
    %v283 = vpop.permute.xlu0 %282
    %v286 = vadd.f32 %v258, %v281
    %v287 = vadd.f32 %v259, %v283
    %v288 = vmax.f32 %v272, 0.0
    %v289 = vmax.f32 %v273, 0.0
    %v290 = vld [vmem:[%s4] sm:$0xff]
    %v291 = vld [vmem:[%s4 + $0x8] sm:$0xff]
    %v292 = vld [vmem:[%s4 + $0x10] sm:$0xff]
    %v293 = vld [vmem:[%s4 + $0x18] sm:$0xff]
    %v294 = vld [vmem:[%s4 + $0x20] sm:$0xff]
    %v295 = vld [vmem:[%s4 + $0x28] sm:$0xff]
    %v296 = vmax.f32 %v286, 0.0
    %v297 = vmax.f32 %v287, 0.0
    %s298 = scalar_lea.vmem %s4, 48
    %v299 = vld [vmem:[%s298] sm:$0xff]
    %v300 = vld [vmem:[%s298 + $0x8] sm:$0xff]
    %v301 = vld [vmem:[%s298 + $0x10] sm:$0xff]
    %v302 = vld [vmem:[%s298 + $0x18] sm:$0xff]
    %v303 = vld [vmem:[%s298 + $0x20] sm:$0xff]
    %v304 = vld [vmem:[%s298 + $0x28] sm:$0xff]
    %vm305 = vcmask 392192
    %v307 = vsel %vm305, %v296, 0
    %v310 = vsel %vm305, %v297, 0
    %312 = vmatpush.msra.mxu0 0.0
    %313 = vmatpush.msra.mxu0 0.0
    %314 = vmatpush.msra.mxu0 0.0
    %315 = vmatpush.msra.mxu0 0.0
    %316 = vmatpush.msra.mxu0 0.0
    %317 = vmatpush.msra.mxu0 0.0
    %318 = vmatpush.msra.mxu0 0.0
    %319 = vmatpush.msra.mxu0 0.0
    %320 = vmatpush.msra.mxu0 0.0
    %321 = vmatpush.msra.mxu0 0.0
    %322 = vmatpush.msra.mxu0 %v304
    %323 = vmatpush.msra.mxu0 %v303
    %324 = vmatpush.msra.mxu0 %v302
    %325 = vmatpush.msra.mxu0 %v301
    %326 = vmatpush.msra.mxu0 %v300
    %327 = vmatpush.msra.mxu0 %v299
    %328 = vmatmul.f32.gmra.mxu0 %v307
    %v329 = vpop.f32.mrf.mxu0
    %v330 = vadd.f32 0.0, %v329
    %331 = vmatmul.f32.gmra.mxu0 %v310
    %v332 = vpop.f32.mrf.mxu0
    %v333 = vadd.f32 0.0, %v332
    %334 = vdwg.mxu0
    %v336 = vsel %vm305, %v288, 0
    %v339 = vsel %vm305, %v289, 0
    %341 = vmatpush.msra.mxu0 0.0
    %342 = vmatpush.msra.mxu0 0.0
    %343 = vmatpush.msra.mxu0 0.0
    %344 = vmatpush.msra.mxu0 0.0
    %345 = vmatpush.msra.mxu0 0.0
    %346 = vmatpush.msra.mxu0 0.0
    %347 = vmatpush.msra.mxu0 0.0
    %348 = vmatpush.msra.mxu0 0.0
    %349 = vmatpush.msra.mxu0 0.0
    %350 = vmatpush.msra.mxu0 0.0
    %351 = vmatpush.msra.mxu0 %v295
    %352 = vmatpush.msra.mxu0 %v294
    %353 = vmatpush.msra.mxu0 %v293
    %354 = vmatpush.msra.mxu0 %v292
    %355 = vmatpush.msra.mxu0 %v291
    %356 = vmatpush.msra.mxu0 %v290
    %357 = vmatmul.f32.gmra.mxu0 %v336
    %v358 = vpop.f32.mrf.mxu0
    %v359 = vadd.f32 %v330, %v358
    %360 = vmatmul.f32.gmra.mxu0 %v339
    %v361 = vpop.f32.mrf.mxu0
    %v362 = vadd.f32 %v333, %v361
    %363 = vdwg.mxu0
    %v364 = vld [vmem:[%s5] sm:$0x1]
    %v366 = vperm.slane %v364, 0
    %v368 = vadd.f32 %v359, %v366
    %v369 = vadd.f32 %v362, %v366
    %v370 = vmax.f32 %v368, 0.0
    %v371 = vmax.f32 %v369, 0.0
    %v372 = vld [vmem:[%s6] sm:$0xff]
    %v373 = vld [vmem:[%s6 + $0x8] sm:$0xff]
    %v374 = vld [vmem:[%s6 + $0x10] sm:$0xf]
    %vm375 = vcmask 162816
    %v377 = vsel %vm375, %v370, 0
    %v380 = vsel %vm375, %v371, 0
    %vm382 = vcmask 1043456
    %v384 = vsel %vm382, %v374, 0
    %386 = vmatpush.msra.mxu0 0.0
    %387 = vmatpush.msra.mxu0 0.0
    %388 = vmatpush.msra.mxu0 0.0
    %389 = vmatpush.msra.mxu0 0.0
    %390 = vmatpush.msra.mxu0 0.0
    %391 = vmatpush.msra.mxu0 0.0
    %392 = vmatpush.msra.mxu0 0.0
    %393 = vmatpush.msra.mxu0 0.0
    %394 = vmatpush.msra.mxu0 0.0
    %395 = vmatpush.msra.mxu0 0.0
    %396 = vmatpush.msra.mxu0 0.0
    %397 = vmatpush.msra.mxu0 0.0
    %398 = vmatpush.msra.mxu0 0.0
    %399 = vmatpush.msra.mxu0 %v384
    %400 = vmatpush.msra.mxu0 %v373
    %401 = vmatpush.msra.mxu0 %v372
    %402 = vmatmul.f32.gmra.mxu0 %v377
    %v403 = vpop.f32.mrf.mxu0
    %v404 = vadd.f32 0.0, %v403
    %405 = vmatmul.f32.gmra.mxu0 %v380
    %v406 = vpop.f32.mrf.mxu0
    %v407 = vadd.f32 0.0, %v406
    %408 = vdwg.mxu0
    %s409 = sld [smem:[#allocation7]]
    %v410 = vld [vmem:[%s1] sm:$0x3]
    %v411 = vstv %s409
    %v412 = vmul.f32 %v411, %v410
    %v414 = vperm.slane %v412, 0
    %v415 = vlaneseq
    %v416 = vshrl.u32 %v415, 7
    %v417 = vadd.s32 %v416, 1
    %418 = vset.pattern.permute.xlu0 %v417
    %419 = vperm.xlu0 %418, %v414
    %v420 = vpop.permute.xlu0 %419
    %v421 = vperm.slane %v412, 1
    %v422 = vlaneseq
    %v423 = vshrl.u32 %v422, 7
    %v424 = vadd.s32 %v423, 1
    %425 = vset.pattern.permute.xlu0 %v424
    %426 = vperm.xlu0 %425, %v421
    %v427 = vpop.permute.xlu0 %426
    %v430 = vadd.f32 %v404, %v420
    %v431 = vadd.f32 %v407, %v427
    %s432 = sld [smem:[#allocation7 + $0x1]]
    %v433 = vstv %s432
    %v434 = vadd.f32 %v430, %v433
    %v435 = vadd.f32 %v431, %v433
    %438 = vset.pattern.permute.xlu0 0
    %439 = vperm.xlu0 %438, %v434
    %v440 = vpop.permute.xlu0 %439
    %441 = vset.pattern.permute.xlu0 0
    %442 = vperm.xlu0 %441, %v435
    %v443 = vpop.permute.xlu0 %442
    %v444 = vlaneseq
    %v445 = vand.u32 %v444, 127
    %v446 = vperm.slane %v440, %v445
    %v447 = vperm.slane %v443, %v445
    %vm448 = vcmask 1041409
    %v449 = vsel %vm448, %v447, %v446
    %vm451 = vcmask 58368
    %v452 = vsel %vm451, %v449, -inf
    %453 = vmax.xlane.f32.xlu0 %v452
    %v454 = vpop.xlane.xlu0 %453
    %v455 = vmax.f32 %v454, 0.0
    %v457 = vperm.slane %v455, 0
    %v458 = vperm.slane %v455, 1
    %v461 = vsub.f32 %v434, %v457
    %v462 = vsub.f32 %v435, %v458
    %v463 = vmul.f32 %v461, 1.442695
    %v464 = vpow.pop %v463
    %v465 = vmul.f32 %v462, 1.442695
    %v466 = vpow.pop %v465
    %v467 = vsub.f32 0.0, %v455
    %v468 = vmul.f32 %v467, 1.442695
    %v469 = vpow.pop %v468
    %472 = vset.pattern.permute.xlu0 0
    %473 = vperm.xlu0 %472, %v464
    %v474 = vpop.permute.xlu0 %473
    %475 = vset.pattern.permute.xlu0 0
    %476 = vperm.xlu0 %475, %v466
    %v477 = vpop.permute.xlu0 %476
    %v478 = vperm.slane %v474, %v445
    %v479 = vperm.slane %v477, %v445
    %v480 = vsel %vm448, %v479, %v478
    %v482 = vsel %vm451, %v480, 0.0
    %483 = vadd.xlane.f32.xlu0 %v482
    %v484 = vpop.xlane.xlu0 %483
    %v485 = vadd.f32 %v484, %v469
    %v486 = vrcp.pop %v485
    %v487 = vmul.f32 %v485, %v486
    %v488 = vsub.f32 1.0, %v487
    %v489 = vmul.f32 %v486, %v488
    %v490 = vadd.f32 %v486, %v489
    %vm491 = vweird.f32 %v485
    %vm492 = vweird.f32 %v486
    %vm493 = vmor %vm491, %vm492
    %v494 = vsel %vm493, %v486, %v490
    %v495 = vand.u32 2147483647, %v485
    %vm496 = vcmp.eq.f32.partialorder %v495, 8.507059e+37
    %v497 = vand.u32 %v485, 2147483648
    %v498 = vor.u32 1.1754944e-38, %v497
    %v499 = vsel %vm496, %v498, %v494
    %v500 = vmul.f32 1.0, %v499
    %v501 = vmul.f32 %v469, %v500
    %vm502 = vcmask 1024
    %503 = vst.msk [vmem:[#allocation8] sm:$0x3] %vm502, %v501
    %v505 = vperm.slane %v500, 0
    %v506 = vperm.slane %v500, 1
    %v509 = vmul.f32 %v464, %v505
    %v510 = vmul.f32 %v466, %v506
    %513 = vset.pattern.permute.xlu0 0
    %514 = vperm.xlu0 %513, %v509
    %v515 = vpop.permute.xlu0 %514
    %516 = vset.pattern.permute.xlu0 0
    %517 = vperm.xlu0 %516, %v510
    %v518 = vpop.permute.xlu0 %517
    %v519 = vadd.s32 %v445, 4294967295
    %v520 = vperm.slane %v515, %v519
    %v521 = vperm.slane %v518, %v519
    %v522 = vsel %vm448, %v521, %v520
    %vm524 = vcmask 66568
    %525 = vst.msk [vmem:[#allocation8] sm:$0x3] %vm524, %v522
    // Predicated region
    $region46: #{tpu_custom_call.1} parent=1 // pred_check
      _
    $region47: #{tpu_custom_call.1} parent=1 // pred_check_branch
      %527 = sbr.rel (0) target = $region49
    $region48: #{tpu_custom_call.1} parent=1 // pred_region
      %529 = vsyncadd [#allocation3], 0
      %s531 = sshll.u32 [#allocation8], 4
      %s532 = int_to_ptr.vmem [resolvable:$true] %s531
      %s533 = sshll.u32 %s8, 4
      %s534 = int_to_ptr.hbm [resolvable:$true] %s533
      %536 = dma.vmem_to_hbm [thread:$0]  %s532, 32, %s534, [#allocation3]
    $region49: #{tpu_custom_call.1} parent=1 // pred_fallthru
      _
    // Predicated region
    $region50: #{tpu_custom_call.1} parent=1 // pred_check
      _
    $region51: #{tpu_custom_call.1} parent=1 // pred_check_branch
      %538 = sbr.rel (0) target = $region53
    $region52: #{tpu_custom_call.1} parent=1 // pred_region
      %540 = dma.done [#allocation3], 32
    $region53: #{tpu_custom_call.1} parent=1 // pred_fallthru
      _
    %541 = vsyncpa [#allocation3], 1
    %542 = vsyncpa [#allocation4], 1
    %543 = vsyncpa [#allocation6], 1

</llo_original>
